<compile_context>
chip_gen: v7x
topology: tpu7x:2x2x1
jax: 0.10.0
libtpu: 0.0.40
codegen_flags: <defaults>
</compile_context>

<pallas_src>
import functools

import jax
import jax.numpy as jnp
from jax import lax
from jax.experimental import pallas as pl
from jax.experimental.pallas import tpu as pltpu

_LANES = 128
_TARGET_BLOCK_BYTES = 2 * 1024 * 1024   # per-input per-block (f32)


def _round_up(x, m):
    return ((x + m - 1) // m) * m


def _dice_sums_kernel(p_ref, t_ref, i_out, p_out, t_out,
                      i_acc, p_acc, t_acc, *,
                      d_chunks, cps, rem, b_tile, tile_d, has_phantom):
    s = pl.program_id(1)                 # reduction-axis split (v7x dual-TC)
    j = pl.program_id(2)                 # local chunk index within the split
    g = s * cps + j                      # global chunk index along D

    @pl.when(j == 0)
    def _():
        i_acc[...] = jnp.zeros_like(i_acc)
        p_acc[...] = jnp.zeros_like(p_acc)
        t_acc[...] = jnp.zeros_like(t_acc)

    one = jnp.float32(1.0)
    zero = jnp.float32(0.0)

    def accumulate(x, t):
        # sigmoid(x) >= 0.5  <=>  x >= 0  (exact, sigmoid is monotone): no EUP
        # exp and no divide in the steady state.
        pos = x >= 0.0
        p_bin = jnp.where(pos, one, zero)
        pt = jnp.where(pos, t, zero)     # thresholded-predict * target (select, no mul)
        i_acc[...] += jnp.sum(pt, axis=1, keepdims=True)
        p_acc[...] += jnp.sum(p_bin, axis=1, keepdims=True)
        t_acc[...] += jnp.sum(t, axis=1, keepdims=True)

    def visit_chunk():
        x = p_ref[...].astype(jnp.float32)
        t = t_ref[...].astype(jnp.float32)
        if rem == 0:
            accumulate(x, t)             # mask-free path for every chunk
        else:
            # Only the final chunk along D carries a ragged lane tail; pay for
            # the iota/selects once there instead of on every chunk.
            @pl.when(g != d_chunks - 1)
            def _():
                accumulate(x, t)

            @pl.when(g == d_chunks - 1)
            def _():
                lane = lax.broadcasted_iota(jnp.int32, (b_tile, tile_d), 1)
                valid = lane < rem
                accumulate(jnp.where(valid, x, jnp.float32(-1.0)),
                           jnp.where(valid, t, zero))

    if has_phantom:
        # Odd chunk count split 2-way: split 1 has one padded (phantom) step
        # whose (clamped) block re-reads valid data — just skip accumulating it.
        @pl.when(g < d_chunks)
        def _():
            visit_chunk()
    else:
        visit_chunk()

    @pl.when(j == pl.num_programs(2) - 1)
    def _():
        slab = i_out.shape[1:]           # (b_tile, 128) lane-dense output slab
        i_out[0] = jnp.broadcast_to(i_acc[...], slab)
        p_out[0] = jnp.broadcast_to(p_acc[...], slab)
        t_out[0] = jnp.broadcast_to(t_acc[...], slab)


def dice_loss_with_sigmoid(predict, target, *, block_bytes=_TARGET_BLOCK_BYTES):
    assert predict.shape == target.shape
    n = int(predict.shape[0])
    d = 1
    for dim in predict.shape[1:]:
        d *= int(dim)
    assert n >= 1 and d >= 1

    # `.view(N, -1)` on a contiguous tensor is metadata-only: plain reshape,
    # no padding / no extra HBM copies.
    p2 = predict.reshape(n, d)
    t2 = target.reshape(n, d)

    d_pad = _round_up(d, _LANES)
    max_elems = max(block_bytes // 4, _LANES)     # f32 elements per input block

    # ---- batch tile (fold rows together when D is small) --------------------
    if n <= 8:
        b_tile = n                                # block dim == full dim is legal
    else:
        rows_per_block = max_elems // d_pad
        if rows_per_block >= 8:
            b_tile = min(_round_up(n, 8), (rows_per_block // 8) * 8)
        else:
            b_tile = 8
    n_blocks = pl.cdiv(n, b_tile)

    # ---- reduction (D) tile: multiple of 128, ~2 MiB per input block --------
    tile_d = min(d_pad, max(_LANES, (max_elems // b_tile) // _LANES * _LANES))
    d_chunks = pl.cdiv(d, tile_d)
    rem = d % tile_d                              # ragged lane tail (0 = none)

    # ---- v7x: give the second TensorCore work when batch has no parallelism -
    n_split = 2 if (n_blocks == 1 and d_chunks >= 2) else 1
    cps = pl.cdiv(d_chunks, n_split)              # chunks per split
    has_phantom = (n_split * cps) != d_chunks     # odd chunk count under a split

    kernel = functools.partial(
        _dice_sums_kernel,
        d_chunks=d_chunks, cps=cps, rem=rem,
        b_tile=b_tile, tile_d=tile_d, has_phantom=has_phantom)

    def in_map(i, s, j):
        # Clamp so a phantom step of split 1 stays in-bounds (its contribution
        # is skipped inside the kernel).
        return (i, jnp.minimum(s * cps + j, d_chunks - 1))

    in_spec = pl.BlockSpec((b_tile, tile_d), in_map)
    out_spec = pl.BlockSpec((1, b_tile, _LANES), lambda i, s, j: (s, i, 0))
    out_sds = jax.ShapeDtypeStruct((n_split, n, _LANES), jnp.float32)

    i_out, p_out, t_out = pl.pallas_call(
        kernel,
        out_shape=(out_sds, out_sds, out_sds),
        grid_spec=pltpu.PrefetchScalarGridSpec(
            num_scalar_prefetch=0,
            grid=(n_blocks, n_split, cps),
            in_specs=[in_spec, in_spec],
            out_specs=[out_spec, out_spec, out_spec],
            scratch_shapes=[pltpu.VMEM((b_tile, 1), jnp.float32)] * 3,
        ),
        compiler_params=pltpu.CompilerParams(
            dimension_semantics=("parallel", "parallel", "arbitrary"),
            vmem_limit_bytes=32 * 1024 * 1024),
    )(p2, t2)

    # Tiny O(N) epilogue: combine the split partials and take the dice ratio.
    inter = jnp.sum(i_out[:, :, 0], axis=0)
    psum = jnp.sum(p_out[:, :, 0], axis=0)
    tsum = jnp.sum(t_out[:, :, 0], axis=0)
    smooth = jnp.float32(1.0)
    dice = 2.0 * (inter + smooth) / (psum + tsum + smooth)
    return 1.0 - jnp.sum(dice) / n


class DiceLoss_with_sigmoid:
    """JAX/Pallas port of the PyTorch DiceLoss_with_sigmoid module."""

    def __call__(self, predict, target):
        return dice_loss_with_sigmoid(predict, target)


def _reference(predict, target):
    p = jax.nn.sigmoid(predict.astype(jnp.float32))
    p = jnp.where(p >= 0.5, 1.0, 0.0)
    n = predict.shape[0]
    pf = p.reshape(n, -1)
    tf = target.reshape(n, -1).astype(jnp.float32)
    inter = jnp.sum(pf * tf, axis=1)
    dice = 2.0 * (inter + 1.0) / (jnp.sum(pf, axis=1) + jnp.sum(tf, axis=1) + 1.0)
    return 1.0 - jnp.sum(dice) / n


if __name__ == "__main__":
    key = jax.random.PRNGKey(0)

    # (shape, block_bytes) — the small block_bytes cases exercise the
    # multi-chunk, ragged-tail, 2-way-split and phantom-step paths at tiny sizes.
    cases = [
        ((2, 4, 16, 16), _TARGET_BLOCK_BYTES),  # main shape: single block, no mask
        ((2, 3, 7, 9), _TARGET_BLOCK_BYTES),    # D % 128 != 0: masked last chunk
        ((1, 5, 16, 16), 2048),                 # multi-chunk + split + phantom + mask
    ]

    for idx, (shape, bb) in enumerate(cases):
        k1, k2 = jax.random.split(jax.random.fold_in(key, idx))
        predict = jax.random.normal(k1, shape, dtype=jnp.float32)
        target = (jax.random.uniform(k2, shape) > 0.5).astype(jnp.float32)

        if bb == _TARGET_BLOCK_BYTES:
            loss = DiceLoss_with_sigmoid()(predict, target)
        else:
            loss = dice_loss_with_sigmoid(predict, target, block_bytes=bb)
        loss = jax.block_until_ready(loss)

        ref = _reference(predict, target)
        assert loss.shape == ()
        assert jnp.allclose(loss, ref, atol=1e-5, rtol=1e-5), (shape, loss, ref)

    print("KERNEL_OK")
</pallas_src>

<mosaic_0001>
module attributes {stable_mosaic.version = 11 : i64} {
  func.func @_dice_sums_kernel(%arg0: i32, %arg1: i32, %arg2: i32, %arg3: memref<2x1024xf32, #tpu.memory_space<vmem>>, %arg4: memref<2x1024xf32, #tpu.memory_space<vmem>>, %arg5: memref<1x2x128xf32, #tpu.memory_space<vmem>>, %arg6: memref<1x2x128xf32, #tpu.memory_space<vmem>>, %arg7: memref<1x2x128xf32, #tpu.memory_space<vmem>>, %arg8: memref<2x1xf32, #tpu.memory_space<vmem>>, %arg9: memref<2x1xf32, #tpu.memory_space<vmem>>, %arg10: memref<2x1xf32, #tpu.memory_space<vmem>>) attributes {dimension_semantics = [#tpu.dimension_semantics<parallel>, #tpu.dimension_semantics<parallel>, #tpu.dimension_semantics<arbitrary>], iteration_bounds = array<i64: 1, 1, 1>, scalar_prefetch = 0 : i64, scratch_operands = 3 : i64, tpu.core_type = #tpu.core_type<tc>, window_params = [{transform_indices = @transform_0, window_bounds = array<i64: 2, 1024>}, {transform_indices = @transform_1, window_bounds = array<i64: 2, 1024>}, {transform_indices = @transform_2, window_bounds = array<i64: 1, 2, 128>}, {transform_indices = @transform_3, window_bounds = array<i64: 1, 2, 128>}, {transform_indices = @transform_4, window_bounds = array<i64: 1, 2, 128>}]} {
    %c0_i32 = arith.constant 0 : i32
    %0 = arith.cmpi eq, %arg2, %c0_i32 : i32
    %1 = arith.extui %0 : i1 to i32
    %c0_i32_0 = arith.constant 0 : i32
    %2 = arith.cmpi ne, %1, %c0_i32_0 : i32
    scf.if %2 {
      %cst_24 = arith.constant 0.000000e+00 : f32
      %30 = vector.broadcast %cst_24 : f32 to vector<2x1xf32>
      %c0_25 = arith.constant 0 : index
      %c0_26 = arith.constant 0 : index
      %31 = vector.load %arg8[%c0_25, %c0_26] : memref<2x1xf32, #tpu.memory_space<vmem>>, vector<2x1xf32>
      tpu.vector_store %arg8[%c0_25, %c0_26], %30 {strides = array<i32>} : memref<2x1xf32, #tpu.memory_space<vmem>>, vector<2x1xf32>,
      %cst_27 = arith.constant 0.000000e+00 : f32
      %32 = vector.broadcast %cst_27 : f32 to vector<2x1xf32>
      %c0_28 = arith.constant 0 : index
      %c0_29 = arith.constant 0 : index
      %33 = vector.load %arg9[%c0_28, %c0_29] : memref<2x1xf32, #tpu.memory_space<vmem>>, vector<2x1xf32>
      tpu.vector_store %arg9[%c0_28, %c0_29], %32 {strides = array<i32>} : memref<2x1xf32, #tpu.memory_space<vmem>>, vector<2x1xf32>,
      %cst_30 = arith.constant 0.000000e+00 : f32
      %34 = vector.broadcast %cst_30 : f32 to vector<2x1xf32>
      %c0_31 = arith.constant 0 : index
      %c0_32 = arith.constant 0 : index
      %35 = vector.load %arg10[%c0_31, %c0_32] : memref<2x1xf32, #tpu.memory_space<vmem>>, vector<2x1xf32>
      tpu.vector_store %arg10[%c0_31, %c0_32], %34 {strides = array<i32>} : memref<2x1xf32, #tpu.memory_space<vmem>>, vector<2x1xf32>,
    } else {
    }
    %c0 = arith.constant 0 : index
    %c0_1 = arith.constant 0 : index
    %3 = vector.load %arg3[%c0, %c0_1] : memref<2x1024xf32, #tpu.memory_space<vmem>>, vector<2x1024xf32>
    %c0_2 = arith.constant 0 : index
    %c0_3 = arith.constant 0 : index
    %4 = vector.load %arg4[%c0_2, %c0_3] : memref<2x1024xf32, #tpu.memory_space<vmem>>, vector<2x1024xf32>
    %cst = arith.constant 0.000000e+00 : f32
    %5 = vector.broadcast %cst : f32 to vector<2x1024xf32>
    %6 = arith.cmpf oge, %3, %5 : vector<2x1024xf32>
    %cst_4 = arith.constant 1.000000e+00 : f32
    %cst_5 = arith.constant 0.000000e+00 : f32
    %7 = vector.broadcast %cst_4 : f32 to vector<2x1024xf32>
    %8 = vector.broadcast %cst_5 : f32 to vector<2x1024xf32>
    %9 = arith.select %6, %7, %8 : vector<2x1024xi1>, vector<2x1024xf32>
    %cst_6 = arith.constant 0.000000e+00 : f32
    %10 = vector.broadcast %cst_6 : f32 to vector<2x1024xf32>
    %11 = arith.select %6, %4, %10 : vector<2x1024xi1>, vector<2x1024xf32>
    %c0_7 = arith.constant 0 : index
    %c0_8 = arith.constant 0 : index
    %12 = vector.load %arg8[%c0_7, %c0_8] : memref<2x1xf32, #tpu.memory_space<vmem>>, vector<2x1xf32>
    %cst_9 = arith.constant dense<0.000000e+00> : vector<2xf32>
    %13 = vector.multi_reduction <add>, %11, %cst_9 [1] : vector<2x1024xf32> to vector<2xf32>
    %14 = vector.shape_cast %13 : vector<2xf32> to vector<2x1xf32>
    %15 = arith.addf %12, %14 : vector<2x1xf32>
    %c0_10 = arith.constant 0 : index
    %c0_11 = arith.constant 0 : index
    %16 = vector.load %arg8[%c0_10, %c0_11] : memref<2x1xf32, #tpu.memory_space<vmem>>, vector<2x1xf32>
    tpu.vector_store %arg8[%c0_10, %c0_11], %15 {strides = array<i32>} : memref<2x1xf32, #tpu.memory_space<vmem>>, vector<2x1xf32>,
    %c0_12 = arith.constant 0 : index
    %c0_13 = arith.constant 0 : index
    %17 = vector.load %arg9[%c0_12, %c0_13] : memref<2x1xf32, #tpu.memory_space<vmem>>, vector<2x1xf32>
    %cst_14 = arith.constant dense<0.000000e+00> : vector<2xf32>
    %18 = vector.multi_reduction <add>, %9, %cst_14 [1] : vector<2x1024xf32> to vector<2xf32>
    %19 = vector.shape_cast %18 : vector<2xf32> to vector<2x1xf32>
    %20 = arith.addf %17, %19 : vector<2x1xf32>
    %c0_15 = arith.constant 0 : index
    %c0_16 = arith.constant 0 : index
    %21 = vector.load %arg9[%c0_15, %c0_16] : memref<2x1xf32, #tpu.memory_space<vmem>>, vector<2x1xf32>
    tpu.vector_store %arg9[%c0_15, %c0_16], %20 {strides = array<i32>} : memref<2x1xf32, #tpu.memory_space<vmem>>, vector<2x1xf32>,
    %c0_17 = arith.constant 0 : index
    %c0_18 = arith.constant 0 : index
    %22 = vector.load %arg10[%c0_17, %c0_18] : memref<2x1xf32, #tpu.memory_space<vmem>>, vector<2x1xf32>
    %cst_19 = arith.constant dense<0.000000e+00> : vector<2xf32>
    %23 = vector.multi_reduction <add>, %4, %cst_19 [1] : vector<2x1024xf32> to vector<2xf32>
    %24 = vector.shape_cast %23 : vector<2xf32> to vector<2x1xf32>
    %25 = arith.addf %22, %24 : vector<2x1xf32>
    %c0_20 = arith.constant 0 : index
    %c0_21 = arith.constant 0 : index
    %26 = vector.load %arg10[%c0_20, %c0_21] : memref<2x1xf32, #tpu.memory_space<vmem>>, vector<2x1xf32>
    tpu.vector_store %arg10[%c0_20, %c0_21], %25 {strides = array<i32>} : memref<2x1xf32, #tpu.memory_space<vmem>>, vector<2x1xf32>,
    %c0_i32_22 = arith.constant 0 : i32
    %27 = arith.cmpi eq, %arg2, %c0_i32_22 : i32
    %28 = arith.extui %27 : i1 to i32
    %c0_i32_23 = arith.constant 0 : i32
    %29 = arith.cmpi ne, %28, %c0_i32_23 : i32
    scf.if %29 {
      %c0_24 = arith.constant 0 : index
      %c0_25 = arith.constant 0 : index
      %30 = vector.load %arg8[%c0_24, %c0_25] : memref<2x1xf32, #tpu.memory_space<vmem>>, vector<2x1xf32>
      %31 = vector.shape_cast %30 : vector<2x1xf32> to vector<2x1xf32>
      %32 = vector.broadcast %31 : vector<2x1xf32> to vector<2x128xf32>
      %c0_26 = arith.constant 0 : index
      %c0_27 = arith.constant 0 : index
      %c0_28 = arith.constant 0 : index
      %33 = vector.load %arg5[%c0_26, %c0_27, %c0_28] : memref<1x2x128xf32, #tpu.memory_space<vmem>>, vector<1x2x128xf32>
      %34 = vector.shape_cast %33 : vector<1x2x128xf32> to vector<2x128xf32>
      %35 = vector.shape_cast %32 : vector<2x128xf32> to vector<1x2x128xf32>
      tpu.vector_store %arg5[%c0_26, %c0_27, %c0_28], %35 {strides = array<i32>} : memref<1x2x128xf32, #tpu.memory_space<vmem>>, vector<1x2x128xf32>,
      %c0_29 = arith.constant 0 : index
      %c0_30 = arith.constant 0 : index
      %36 = vector.load %arg9[%c0_29, %c0_30] : memref<2x1xf32, #tpu.memory_space<vmem>>, vector<2x1xf32>
      %37 = vector.shape_cast %36 : vector<2x1xf32> to vector<2x1xf32>
      %38 = vector.broadcast %37 : vector<2x1xf32> to vector<2x128xf32>
      %c0_31 = arith.constant 0 : index
      %c0_32 = arith.constant 0 : index
      %c0_33 = arith.constant 0 : index
      %39 = vector.load %arg6[%c0_31, %c0_32, %c0_33] : memref<1x2x128xf32, #tpu.memory_space<vmem>>, vector<1x2x128xf32>
      %40 = vector.shape_cast %39 : vector<1x2x128xf32> to vector<2x128xf32>
      %41 = vector.shape_cast %38 : vector<2x128xf32> to vector<1x2x128xf32>
      tpu.vector_store %arg6[%c0_31, %c0_32, %c0_33], %41 {strides = array<i32>} : memref<1x2x128xf32, #tpu.memory_space<vmem>>, vector<1x2x128xf32>,
      %c0_34 = arith.constant 0 : index
      %c0_35 = arith.constant 0 : index
      %42 = vector.load %arg10[%c0_34, %c0_35] : memref<2x1xf32, #tpu.memory_space<vmem>>, vector<2x1xf32>
      %43 = vector.shape_cast %42 : vector<2x1xf32> to vector<2x1xf32>
      %44 = vector.broadcast %43 : vector<2x1xf32> to vector<2x128xf32>
      %c0_36 = arith.constant 0 : index
      %c0_37 = arith.constant 0 : index
      %c0_38 = arith.constant 0 : index
      %45 = vector.load %arg7[%c0_36, %c0_37, %c0_38] : memref<1x2x128xf32, #tpu.memory_space<vmem>>, vector<1x2x128xf32>
      %46 = vector.shape_cast %45 : vector<1x2x128xf32> to vector<2x128xf32>
      %47 = vector.shape_cast %44 : vector<2x128xf32> to vector<1x2x128xf32>
      tpu.vector_store %arg7[%c0_36, %c0_37, %c0_38], %47 {strides = array<i32>} : memref<1x2x128xf32, #tpu.memory_space<vmem>>, vector<1x2x128xf32>,
    } else {
    }
    return
  }
  func.func @transform_0(%arg0: i32, %arg1: i32, %arg2: i32) -> (i32, i32) {
    %c1_i32 = arith.constant 1 : i32
    %0 = arith.muli %arg1, %c1_i32 : i32
    %1 = arith.addi %0, %arg2 : i32
    %c0_i32 = arith.constant 0 : i32
    %2 = arith.minsi %1, %c0_i32 : i32
    %c0_i32_0 = arith.constant 0 : i32
    return %arg0, %2 : i32, i32
  }
  func.func @transform_1(%arg0: i32, %arg1: i32, %arg2: i32) -> (i32, i32) {
    %c1_i32 = arith.constant 1 : i32
    %0 = arith.muli %arg1, %c1_i32 : i32
    %1 = arith.addi %0, %arg2 : i32
    %c0_i32 = arith.constant 0 : i32
    %2 = arith.minsi %1, %c0_i32 : i32
    %c0_i32_0 = arith.constant 0 : i32
    return %arg0, %2 : i32, i32
  }
  func.func @transform_2(%arg0: i32, %arg1: i32, %arg2: i32) -> (i32, i32, i32) {
    %c0_i32 = arith.constant 0 : i32
    %c0_i32_0 = arith.constant 0 : i32
    return %arg1, %arg0, %c0_i32 : i32, i32, i32
  }
  func.func @transform_3(%arg0: i32, %arg1: i32, %arg2: i32) -> (i32, i32, i32) {
    %c0_i32 = arith.constant 0 : i32
    %c0_i32_0 = arith.constant 0 : i32
    return %arg1, %arg0, %c0_i32 : i32, i32, i32
  }
  func.func @transform_4(%arg0: i32, %arg1: i32, %arg2: i32) -> (i32, i32, i32) {
    %c0_i32 = arith.constant 0 : i32
    %c0_i32_0 = arith.constant 0 : i32
    return %arg1, %arg0, %c0_i32 : i32, i32, i32
  }
}

</mosaic_0001>

<llo_original>
// kernel: tpu_custom_call.1
$region0: #{tpu_custom_call.1}
  #allocation0 [shape = 'u32[]', space=smem, size = 0x4, offset = 0x4, fixed_abs, tag = 'smem constant byte address 0x4 - core index']
  #allocation1 [shape = 'u32[144,128]{1,0:T(1,128)}', space=vmem, size = 0x12000, scoped, tag = 'internal scratch']
  #allocation2 [shape = 'f32[2,1]{1,0:T(2,128)}', space=vmem, size = 0x400, scoped, tag = 'scratch operand']
  #allocation3 [shape = 'f32[2,1]{1,0:T(2,128)}', space=vmem, size = 0x400, scoped, tag = 'scratch operand']
  #allocation4 [shape = 'f32[2,1]{1,0:T(2,128)}', space=vmem, size = 0x400, scoped, tag = 'scratch operand']
  %s0 = inlined_call_operand.hbm [shape: f32[2,1024], index: 0, kind: input, shape index: {}]
  %s1 = inlined_call_operand.hbm [shape: f32[2,1024], index: 1, kind: input, shape index: {}]
  %s2 = inlined_call_operand.hbm [shape: f32[1,2,128], index: 2, kind: output, shape index: {0}]
  %s3 = inlined_call_operand.hbm [shape: f32[1,2,128], index: 3, kind: output, shape index: {1}]
  %s4 = inlined_call_operand.hbm [shape: f32[1,2,128], index: 4, kind: output, shape index: {2}]
  %5 = xla_tuple %s2, %s3, %s4
  %s6 = sld [smem:[#allocation0]]
  $region50: #{tpu_custom_call.1} parent=0
    _
  %s8 = ssub.s32 1, %s6
  %s9 = scalar_select 0, %s8, %s6
  $region1: #{tpu_custom_call.1} parent=0
    #allocation5 [shape = 'u8[8192]{0}', space=vmem, size = 0x2000, scoped, tag = 'input window, operand 0, single buffered']
    #allocation6 [shape = 's32[1]{0}', space=sflag, size = 0x4, scoped, tag = 'scoped memory for tpu_custom_call.1']
    #allocation7 [shape = 's32[1]{0}', space=sflag, size = 0x4, scoped, tag = 'scoped memory for tpu_custom_call.1']
    #allocation8 [shape = 'u8[8192]{0}', space=vmem, size = 0x2000, scoped, tag = 'input window, operand 1, single buffered']
    #allocation9 [shape = 's32[1]{0}', space=sflag, size = 0x4, scoped, tag = 'scoped memory for tpu_custom_call.1']
    #allocation10 [shape = 'u8[1024]{0}', space=vmem, size = 0x400, scoped, tag = 'output window, operand 0, single buffered']
    #allocation11 [shape = 'u8[1024]{0}', space=vmem, size = 0x400, scoped, tag = 'output window, operand 1, single buffered']
    #allocation12 [shape = 's32[1]{0}', space=sflag, size = 0x4, scoped, tag = 'scoped memory for tpu_custom_call.1']
    #allocation13 [shape = 'u8[1024]{0}', space=vmem, size = 0x400, scoped, tag = 'output window, operand 2, single buffered']
    %10 = vsyncpa [#allocation6], 0
    %11 = vsyncpa [#allocation9], 0
    %12 = vsyncpa [#allocation7], 0
    %13 = vsyncpa [#allocation12], 0
    // Predicated region
    $region2: #{tpu_custom_call.1} parent=1 // pred_check
      _
    $region3: #{tpu_custom_call.1} parent=1 // pred_check_branch
      %15 = sbr.rel (0) target = $region5
    $region4: #{tpu_custom_call.1} parent=1 // pred_region
      %s16 = sadd.s32 0, 0
      %p17 = scmp.lt.s32.totalorder %s16, 0
      %s18 = scalar_select %p17, %s16, 0
      %s19 = smul.u32 8, %s18
      %s21 = ssub.s32 256, 256
      %22 = vsyncadd [#allocation6], %s21
      %s23 = smul.addr %s19, 32
      %s24 = scalar_lea.hbm %s0, %s23
      %s26 = sshll.u32 [#allocation5], 4
      %s27 = int_to_ptr.vmem [resolvable:$true] %s26
      %29 = dma.hbm_to_vmem [thread:$0]  %s24, 256, %s27, [#allocation6]
    $region5: #{tpu_custom_call.1} parent=1 // pred_fallthru
      _
    // Predicated region
    $region6: #{tpu_custom_call.1} parent=1 // pred_check
      _
    $region7: #{tpu_custom_call.1} parent=1 // pred_check_branch
      %31 = sbr.rel (0) target = $region9
    $region8: #{tpu_custom_call.1} parent=1 // pred_region
      %s32 = sadd.s32 0, 0
      %p33 = scmp.lt.s32.totalorder %s32, 0
      %s34 = scalar_select %p33, %s32, 0
      %s35 = smul.u32 8, %s34
      %s37 = ssub.s32 256, 256
      %38 = vsyncadd [#allocation9], %s37
      %s39 = smul.addr %s35, 32
      %s40 = scalar_lea.hbm %s1, %s39
      %s42 = sshll.u32 [#allocation8], 4
      %s43 = int_to_ptr.vmem [resolvable:$true] %s42
      %45 = dma.hbm_to_vmem [thread:$0]  %s40, 256, %s43, [#allocation9]
    $region9: #{tpu_custom_call.1} parent=1 // pred_fallthru
      _
    // Predicated region
    $region10: #{tpu_custom_call.1} parent=1 // pred_check
      _
    $region11: #{tpu_custom_call.1} parent=1 // pred_check_branch
      %47 = sbr.rel (0) target = $region13
    $region12: #{tpu_custom_call.1} parent=1 // pred_region
      %48 = dma.done [#allocation6], 256
    $region13: #{tpu_custom_call.1} parent=1 // pred_fallthru
      _
    // Predicated region
    $region14: #{tpu_custom_call.1} parent=1 // pred_check
      _
    $region15: #{tpu_custom_call.1} parent=1 // pred_check_branch
      %50 = sbr.rel (0) target = $region17
    $region16: #{tpu_custom_call.1} parent=1 // pred_region
      %51 = dma.done [#allocation9], 256
    $region17: #{tpu_custom_call.1} parent=1 // pred_fallthru
      _
    %s52 = sadd.s32 0, 0
    %p53 = scmp.lt.s32.totalorder %s52, 0
    %s54 = scalar_select %p53, %s52, 0
    %s55 = smul.u32 8, %s54
    %s56 = sadd.s32 0, 0
    %p57 = scmp.lt.s32.totalorder %s56, 0
    %s58 = scalar_select %p57, %s56, 0
    %s59 = smul.u32 8, %s58
    %p60 = scmp.eq.s32.totalorder 0, 0
    // Predicated region
    $region18: #{tpu_custom_call.1} parent=1 // pred_check
      %p61 = pneg %p60
    $region19: #{tpu_custom_call.1} parent=1 // pred_check_branch
      %63 = sbr.rel (%p61) target = $region21
    $region20: #{tpu_custom_call.1} parent=1 // pred_region
      %vm64 = vcmask 1024
      %65 = vst.msk [vmem:[#allocation2] sm:$0x3] %vm64, 0.0
      %66 = vst.msk [vmem:[#allocation3] sm:$0x3] %vm64, 0.0
      %67 = vst.msk [vmem:[#allocation4] sm:$0x3] %vm64, 0.0
    $region21: #{tpu_custom_call.1} parent=1 // pred_fallthru
      _
    %v68 = vld [vmem:[#allocation5] sm:$0xff]
    %v69 = vld [vmem:[#allocation5 + $0x8] sm:$0xff]
    %v70 = vld [vmem:[#allocation8] sm:$0xff]
    %v71 = vld [vmem:[#allocation8 + $0x8] sm:$0xff]
    %vm72 = vcmp.ge.f32.partialorder %v68, 0.0
    %vm73 = vcmp.ge.f32.partialorder %v69, 0.0
    %v74 = vsel %vm72, 1.0, 0.0
    %v75 = vsel %vm73, 1.0, 0.0
    %v76 = vsel %vm72, %v70, 0.0
    %v77 = vsel %vm73, %v71, 0.0
    %v78 = vld [vmem:[#allocation2] sm:$0x3]
    %v81 = vcombine.high %v76, %v76
    %v83 = vunpack.c.l.s4 1983009808
    %v84 = vunpack.c.0.s8 %v83
    %v85 = vlaneseq
    %v86 = vshrl.u32 %v85, 7
    %v87 = vsub.s32 %v84, %v86
    %v88 = vrot.slane %v76, %v87
    %v90 = vunpack.c.l.s4 1983009808
    %v91 = vunpack.c.0.s8 %v90
    %v92 = vlaneseq
    %v93 = vshrl.u32 %v92, 7
    %v94 = vsub.s32 %v91, %v93
    %v95 = vrot.slane %v81, %v94
    %v96 = vcombine.high %v88, %v88
    %v97 = vcombine.high %v95, %v95
    %v98 = vcombine.high %v77, %v77
    %v100 = vunpack.c.l.s4 1983009808
    %v101 = vunpack.c.0.s8 %v100
    %v102 = vlaneseq
    %v103 = vshrl.u32 %v102, 7
    %v104 = vsub.s32 %v101, %v103
    %v105 = vrot.slane %v77, %v104
    %v107 = vunpack.c.l.s4 1983009808
    %v108 = vunpack.c.0.s8 %v107
    %v109 = vlaneseq
    %v110 = vshrl.u32 %v109, 7
    %v111 = vsub.s32 %v108, %v110
    %v112 = vrot.slane %v98, %v111
    %v113 = vcombine.high %v105, %v105
    %v114 = vcombine.high %v112, %v112
    %vm123 = vcmask 1041408
    %v124 = vsel %vm123, %v88, 0.0
    %v125 = vsel %vm123, %v96, 0.0
    %v126 = vadd.f32 %v124, %v125
    %v127 = vsel %vm123, %v95, 0.0
    %v128 = vadd.f32 %v126, %v127
    %v129 = vsel %vm123, %v97, 0.0
    %v130 = vadd.f32 %v128, %v129
    %v131 = vsel %vm123, %v105, 0.0
    %v132 = vadd.f32 %v130, %v131
    %v133 = vsel %vm123, %v113, 0.0
    %v134 = vadd.f32 %v132, %v133
    %v135 = vsel %vm123, %v112, 0.0
    %v136 = vadd.f32 %v134, %v135
    %v137 = vsel %vm123, %v114, 0.0
    %v138 = vadd.f32 %v136, %v137
    %139 = vadd.xlane.f32.xlu0 %v138
    %v140 = vpop.xlane.xlu0 %139
    %v141 = vadd.f32 %v78, %v140
    %vm142 = vcmask 1024
    %143 = vst.msk [vmem:[#allocation2] sm:$0x3] %vm142, %v141
    %v144 = vld [vmem:[#allocation3] sm:$0x3]
    %v147 = vcombine.high %v74, %v74
    %v149 = vunpack.c.l.s4 1983009808
    %v150 = vunpack.c.0.s8 %v149
    %v151 = vlaneseq
    %v152 = vshrl.u32 %v151, 7
    %v153 = vsub.s32 %v150, %v152
    %v154 = vrot.slane %v74, %v153
    %v156 = vunpack.c.l.s4 1983009808
    %v157 = vunpack.c.0.s8 %v156
    %v158 = vlaneseq
    %v159 = vshrl.u32 %v158, 7
    %v160 = vsub.s32 %v157, %v159
    %v161 = vrot.slane %v147, %v160
    %v162 = vcombine.high %v154, %v154
    %v163 = vcombine.high %v161, %v161
    %v164 = vcombine.high %v75, %v75
    %v166 = vunpack.c.l.s4 1983009808
    %v167 = vunpack.c.0.s8 %v166
    %v168 = vlaneseq
    %v169 = vshrl.u32 %v168, 7
    %v170 = vsub.s32 %v167, %v169
    %v171 = vrot.slane %v75, %v170
    %v173 = vunpack.c.l.s4 1983009808
    %v174 = vunpack.c.0.s8 %v173
    %v175 = vlaneseq
    %v176 = vshrl.u32 %v175, 7
    %v177 = vsub.s32 %v174, %v176
    %v178 = vrot.slane %v164, %v177
    %v179 = vcombine.high %v171, %v171
    %v180 = vcombine.high %v178, %v178
    %v189 = vsel %vm123, %v154, 0.0
    %v190 = vsel %vm123, %v162, 0.0
    %v191 = vadd.f32 %v189, %v190
    %v192 = vsel %vm123, %v161, 0.0
    %v193 = vadd.f32 %v191, %v192
    %v194 = vsel %vm123, %v163, 0.0
    %v195 = vadd.f32 %v193, %v194
    %v196 = vsel %vm123, %v171, 0.0
    %v197 = vadd.f32 %v195, %v196
    %v198 = vsel %vm123, %v179, 0.0
    %v199 = vadd.f32 %v197, %v198
    %v200 = vsel %vm123, %v178, 0.0
    %v201 = vadd.f32 %v199, %v200
    %v202 = vsel %vm123, %v180, 0.0
    %v203 = vadd.f32 %v201, %v202
    %204 = vadd.xlane.f32.xlu0 %v203
    %v205 = vpop.xlane.xlu0 %204
    %v206 = vadd.f32 %v144, %v205
    %207 = vst.msk [vmem:[#allocation3] sm:$0x3] %vm142, %v206
    %v208 = vld [vmem:[#allocation4] sm:$0x3]
    %v211 = vcombine.high %v70, %v70
    %v213 = vunpack.c.l.s4 1983009808
    %v214 = vunpack.c.0.s8 %v213
    %v215 = vlaneseq
    %v216 = vshrl.u32 %v215, 7
    %v217 = vsub.s32 %v214, %v216
    %v218 = vrot.slane %v70, %v217
    %v220 = vunpack.c.l.s4 1983009808
    %v221 = vunpack.c.0.s8 %v220
    %v222 = vlaneseq
    %v223 = vshrl.u32 %v222, 7
    %v224 = vsub.s32 %v221, %v223
    %v225 = vrot.slane %v211, %v224
    %v226 = vcombine.high %v218, %v218
    %v227 = vcombine.high %v225, %v225
    %v228 = vcombine.high %v71, %v71
    %v230 = vunpack.c.l.s4 1983009808
    %v231 = vunpack.c.0.s8 %v230
    %v232 = vlaneseq
    %v233 = vshrl.u32 %v232, 7
    %v234 = vsub.s32 %v231, %v233
    %v235 = vrot.slane %v71, %v234
    %v237 = vunpack.c.l.s4 1983009808
    %v238 = vunpack.c.0.s8 %v237
    %v239 = vlaneseq
    %v240 = vshrl.u32 %v239, 7
    %v241 = vsub.s32 %v238, %v240
    %v242 = vrot.slane %v228, %v241
    %v243 = vcombine.high %v235, %v235
    %v244 = vcombine.high %v242, %v242
    %v253 = vsel %vm123, %v218, 0.0
    %v254 = vsel %vm123, %v226, 0.0
    %v255 = vadd.f32 %v253, %v254
    %v256 = vsel %vm123, %v225, 0.0
    %v257 = vadd.f32 %v255, %v256
    %v258 = vsel %vm123, %v227, 0.0
    %v259 = vadd.f32 %v257, %v258
    %v260 = vsel %vm123, %v235, 0.0
    %v261 = vadd.f32 %v259, %v260
    %v262 = vsel %vm123, %v243, 0.0
    %v263 = vadd.f32 %v261, %v262
    %v264 = vsel %vm123, %v242, 0.0
    %v265 = vadd.f32 %v263, %v264
    %v266 = vsel %vm123, %v244, 0.0
    %v267 = vadd.f32 %v265, %v266
    %268 = vadd.xlane.f32.xlu0 %v267
    %v269 = vpop.xlane.xlu0 %268
    %v270 = vadd.f32 %v208, %v269
    %271 = vst.msk [vmem:[#allocation4] sm:$0x3] %vm142, %v270
    // Predicated region
    $region22: #{tpu_custom_call.1} parent=1 // pred_check
      %p272 = pneg %p60
    $region23: #{tpu_custom_call.1} parent=1 // pred_check_branch
      %274 = sbr.rel (%p272) target = $region25
    $region24: #{tpu_custom_call.1} parent=1 // pred_region
      %v275 = vld [vmem:[#allocation2] sm:$0x3]
      %277 = vset.pattern.permute.xlu0 0
      %278 = vperm.xlu0 %277, %v275
      %v279 = vpop.permute.xlu0 %278
      %281 = vst [vmem:[#allocation10] sm:$0x3] %v279
      %v282 = vld [vmem:[#allocation3] sm:$0x3]
      %284 = vset.pattern.permute.xlu0 0
      %285 = vperm.xlu0 %284, %v282
      %v286 = vpop.permute.xlu0 %285
      %288 = vst [vmem:[#allocation11] sm:$0x3] %v286
      %v289 = vld [vmem:[#allocation4] sm:$0x3]
      %291 = vset.pattern.permute.xlu0 0
      %292 = vperm.xlu0 %291, %v289
      %v293 = vpop.permute.xlu0 %292
      %295 = vst [vmem:[#allocation13] sm:$0x3] %v293
    $region25: #{tpu_custom_call.1} parent=1 // pred_fallthru
      _
    // Predicated region
    $region26: #{tpu_custom_call.1} parent=1 // pred_check
      _
    $region27: #{tpu_custom_call.1} parent=1 // pred_check_branch
      %297 = sbr.rel (0) target = $region29
    $region28: #{tpu_custom_call.1} parent=1 // pred_region
      %s299 = ssub.s32 32, 32
      %300 = vsyncadd [#allocation7], %s299
      %s302 = sshll.u32 [#allocation10], 4
      %s303 = int_to_ptr.vmem [resolvable:$true] %s302
      %305 = dma.vmem_to_hbm [thread:$0]  %s303, 32, %s2, [#allocation7]
    $region29: #{tpu_custom_call.1} parent=1 // pred_fallthru
      _
    // Predicated region
    $region30: #{tpu_custom_call.1} parent=1 // pred_check
      _
    $region31: #{tpu_custom_call.1} parent=1 // pred_check_branch
      %307 = sbr.rel (0) target = $region33
    $region32: #{tpu_custom_call.1} parent=1 // pred_region
      %s309 = ssub.s32 32, 32
      %310 = vsyncadd [#allocation12], %s309
      %s312 = sshll.u32 [#allocation11], 4
      %s313 = int_to_ptr.vmem [resolvable:$true] %s312
      %315 = dma.vmem_to_hbm [thread:$0]  %s313, 32, %s3, [#allocation12]
    $region33: #{tpu_custom_call.1} parent=1 // pred_fallthru
      _
    // Predicated region
    $region34: #{tpu_custom_call.1} parent=1 // pred_check
      _
    $region35: #{tpu_custom_call.1} parent=1 // pred_check_branch
      %317 = sbr.rel (0) target = $region37
    $region36: #{tpu_custom_call.1} parent=1 // pred_region
      %s319 = ssub.s32 32, 32
      %320 = vsyncadd [#allocation12], %s319
      %s322 = sshll.u32 [#allocation13], 4
      %s323 = int_to_ptr.vmem [resolvable:$true] %s322
      %325 = dma.vmem_to_hbm [thread:$0]  %s323, 32, %s4, [#allocation12]
    $region37: #{tpu_custom_call.1} parent=1 // pred_fallthru
      _
    // Predicated region
    $region38: #{tpu_custom_call.1} parent=1 // pred_check
      _
    $region39: #{tpu_custom_call.1} parent=1 // pred_check_branch
      %327 = sbr.rel (0) target = $region41
    $region40: #{tpu_custom_call.1} parent=1 // pred_region
      %328 = dma.done [#allocation7], 32
    $region41: #{tpu_custom_call.1} parent=1 // pred_fallthru
      _
    // Predicated region
    $region42: #{tpu_custom_call.1} parent=1 // pred_check
      _
    $region43: #{tpu_custom_call.1} parent=1 // pred_check_branch
      %330 = sbr.rel (0) target = $region45
    $region44: #{tpu_custom_call.1} parent=1 // pred_region
      %331 = dma.done [#allocation12], 32
    $region45: #{tpu_custom_call.1} parent=1 // pred_fallthru
      _
    // Predicated region
    $region46: #{tpu_custom_call.1} parent=1 // pred_check
      _
    $region47: #{tpu_custom_call.1} parent=1 // pred_check_branch
      %333 = sbr.rel (0) target = $region49
    $region48: #{tpu_custom_call.1} parent=1 // pred_region
      %334 = dma.done [#allocation12], 32
    $region49: #{tpu_custom_call.1} parent=1 // pred_fallthru
      _
    %335 = vsyncpa [#allocation6], 1
    %336 = vsyncpa [#allocation9], 1
    %337 = vsyncpa [#allocation7], 1
    %338 = vsyncpa [#allocation12], 1

</llo_original>
